<compile_context>
chip_gen: v7x
topology: tpu7x:2x2x1
jax: 0.10.0
libtpu: 0.0.40
codegen_flags: <defaults>
</compile_context>

<pallas_src>
import math
from functools import partial, lru_cache

import jax
import jax.numpy as jnp
from jax import lax
from jax.experimental import pallas as pl
from jax.experimental.pallas import tpu as pltpu

BN_EPS = 1e-5
GEM_EPS = 1e-6
GEM_P = 3.0
REDUCTION_DIM = 128                    # cfg.MODEL.HEADS.REDUCTION_DIM

MATMUL_VMEM_LIMIT = 48 * 1024 * 1024   # explicit headroom for v7x's 64 MiB VMEM


def _round_up(x, m):
    return ((x + m - 1) // m) * m


# ------------------------- Pallas kernels -------------------------

def _mm_bn_act_kernel(a_ref, b_ref, scale_ref, shift_ref, *rest,
                      apply_relu, has_residual):
    """Tiled bf16 matmul, fp32 accumulation, fused epilogue:
       y = acc * scale + shift (+ residual) (+ ReLU), emitted in out dtype."""
    if has_residual:
        res_ref, o_ref, acc_ref = rest
    else:
        o_ref, acc_ref = rest

    k = pl.program_id(2)

    @pl.when(k == 0)
    def _():
        acc_ref[...] = jnp.zeros_like(acc_ref)

    acc_ref[...] += jnp.dot(a_ref[...], b_ref[...],
                            preferred_element_type=jnp.float32)

    @pl.when(k == pl.num_programs(2) - 1)
    def _():
        y = acc_ref[...] * scale_ref[...] + shift_ref[...]
        if has_residual:
            y = y + res_ref[...].astype(jnp.float32)
        if apply_relu:
            y = jnp.maximum(y, 0.0)
        o_ref[...] = y.astype(o_ref.dtype)


@lru_cache(maxsize=None)
def _mm_kernel(apply_relu, has_residual):
    return partial(_mm_bn_act_kernel, apply_relu=apply_relu,
                   has_residual=has_residual)


def matmul_bn_act(a, b, scale, shift, *, relu=False, residual=None,
                  out_dtype=jnp.bfloat16):
    """out = act((a @ b) * scale + shift [+ residual]).

    a:(M,K)  b:(K,N)  scale/shift:(N,)  residual: optional (M,N).
    A/B are fed to the MXU as bf16; accumulation and epilogue are fp32.
    Grid = (M_tiles, N_tiles, K_tiles), K innermost (reduction axis last),
    M/N marked "parallel" so v7x can shard across its two TensorCores.
    """
    M, K = a.shape
    K2, N = b.shape
    assert K == K2

    # Tile selection: TM/TN sized toward the 256x256 MXU (v6e/v7x), TK up to
    # 512 to cut K-loop trip count (v5e); everything shrinks gracefully for
    # small layers so blocks stay legal ((8,128) rule) without big pads.
    TM = min(256, _round_up(M, 16))
    TN = 256 if N % 256 == 0 else 128
    if K % 128 == 0:
        TK = 512 if K % 512 == 0 else (256 if K % 256 == 0 else 128)
        Kp = K
    elif K < 128:
        TK, Kp = K, K                      # single K step; full-dim block is legal
    else:
        TK, Kp = 128, _round_up(K, 128)
    Mp = _round_up(M, TM)
    Np = _round_up(N, TN)

    a_p = a.astype(jnp.bfloat16)
    if (Mp, Kp) != (M, K):
        a_p = jnp.pad(a_p, ((0, Mp - M), (0, Kp - K)))
    b_p = b.astype(jnp.bfloat16)
    if (Kp, Np) != (K, N):
        b_p = jnp.pad(b_p, ((0, Kp - K), (0, Np - N)))
    scale_p = scale.reshape(1, N).astype(jnp.float32)
    shift_p = shift.reshape(1, N).astype(jnp.float32)
    if Np != N:
        scale_p = jnp.pad(scale_p, ((0, 0), (0, Np - N)))
        shift_p = jnp.pad(shift_p, ((0, 0), (0, Np - N)))

    in_specs = [
        pl.BlockSpec((TM, TK), lambda m, n, k: (m, k)),
        pl.BlockSpec((TK, TN), lambda m, n, k: (k, n)),
        pl.BlockSpec((1, TN), lambda m, n, k: (0, n)),
        pl.BlockSpec((1, TN), lambda m, n, k: (0, n)),
    ]
    operands = [a_p, b_p, scale_p, shift_p]
    has_residual = residual is not None
    if has_residual:
        r_p = residual.astype(jnp.bfloat16)
        if (Mp, Np) != residual.shape:
            r_p = jnp.pad(r_p, ((0, Mp - M), (0, Np - N)))
        in_specs.append(pl.BlockSpec((TM, TN), lambda m, n, k: (m, n)))
        operands.append(r_p)

    out = pl.pallas_call(
        _mm_kernel(bool(relu), has_residual),
        out_shape=jax.ShapeDtypeStruct((Mp, Np), out_dtype),
        grid=(Mp // TM, Np // TN, Kp // TK),
        in_specs=in_specs,
        out_specs=pl.BlockSpec((TM, TN), lambda m, n, k: (m, n)),
        scratch_shapes=[pltpu.VMEM((TM, TN), jnp.float32)],
        compiler_params=pltpu.CompilerParams(
            dimension_semantics=("parallel", "parallel", "arbitrary"),
            vmem_limit_bytes=MATMUL_VMEM_LIMIT),
    )(*operands)
    if (Mp, Np) != (M, N):
        out = out[:M, :N]
    return out


def _scale_shift_act_kernel(x_ref, scale_ref, shift_ref, o_ref, *, apply_relu):
    y = x_ref[...].astype(jnp.float32) * scale_ref[...] + shift_ref[...]
    if apply_relu:
        y = jnp.maximum(y, 0.0)
    o_ref[...] = y.astype(o_ref.dtype)


@lru_cache(maxsize=None)
def _ss_kernel(apply_relu):
    return partial(_scale_shift_act_kernel, apply_relu=apply_relu)


def scale_shift_act(x, scale, shift, relu, out_dtype=jnp.bfloat16):
    """Fused folded-BN (scale/shift) + optional ReLU, tiled over rows."""
    B, H, W, C = x.shape
    M = B * H * W
    TR = min(1024, _round_up(M, 8))
    Mp = _round_up(M, TR)
    x2 = x.reshape(M, C)
    if Mp != M:
        x2 = jnp.pad(x2, ((0, Mp - M), (0, 0)))
    out = pl.pallas_call(
        _ss_kernel(bool(relu)),
        out_shape=jax.ShapeDtypeStruct((Mp, C), out_dtype),
        grid=(Mp // TR,),
        in_specs=[pl.BlockSpec((TR, C), lambda i: (i, 0)),
                  pl.BlockSpec((1, C), lambda i: (0, 0)),
                  pl.BlockSpec((1, C), lambda i: (0, 0))],
        out_specs=pl.BlockSpec((TR, C), lambda i: (i, 0)),
        compiler_params=pltpu.CompilerParams(
            dimension_semantics=("parallel",)),
    )(x2, scale.reshape(1, C).astype(jnp.float32),
      shift.reshape(1, C).astype(jnp.float32))
    if Mp != M:
        out = out[:M]
    return out.reshape(B, H, W, C)


def _maxpool_kernel(x_ref, o_ref, *, kk):
    x = x_ref[...]                    # (TR, kk, C)
    r = x[:, 0, :]
    for i in range(1, kk):
        r = jnp.maximum(r, x[:, i, :])
    o_ref[...] = r


def _gem_kernel(x_ref, p_ref, o_ref, *, eps, inv_hw):
    p = p_ref[...]                                         # (1, TC)
    x = jnp.maximum(x_ref[...].astype(jnp.float32), eps)   # clamp(min=eps)
    y = jnp.exp(p[:, None, :] * jnp.log(x))                # x ** p
    m = jnp.sum(y, axis=1) * inv_hw                        # adaptive avg pool
    o_ref[...] = jnp.exp(jnp.log(m) * (1.0 / p))           # ** (1/p)


# ------------------------- JAX glue (layout / convs / pooling) -------------------------

def _im2col(x, kh, kw, stride, pad, fill=0.0):
    """x: (B,H,W,C) -> patches (B,OH,OW,kh*kw,C). Used only for the stem maxpool."""
    B, H, W, C = x.shape
    OH = (H + 2 * pad - kh) // stride + 1
    OW = (W + 2 * pad - kw) // stride + 1
    xp = jnp.pad(x, ((0, 0), (pad, pad), (pad, pad), (0, 0)),
                 constant_values=fill)
    cols = []
    for i in range(kh):
        for j in range(kw):
            cols.append(xp[:, i:i + stride * (OH - 1) + 1:stride,
                            j:j + stride * (OW - 1) + 1:stride, :])
    patches = jnp.stack(cols, axis=3)
    return patches, OH, OW


def conv1x1_bn(x, w, scale, shift, *, stride=1, relu=False, residual=None):
    """1x1 Conv2d (no bias) + folded BN [+ residual add] [+ ReLU], all fused
    into the Pallas matmul epilogue."""
    if stride != 1:
        x = x[:, ::stride, ::stride, :]
    B, H, W, Cin = x.shape
    Cout = w.shape[-1]
    a = x.reshape(B * H * W, Cin)
    bmat = w.reshape(Cin, Cout)
    res = residual.reshape(B * H * W, Cout) if residual is not None else None
    out = matmul_bn_act(a, bmat, scale, shift, relu=relu, residual=res)
    return out.reshape(B, H, W, Cout)


def conv_spatial_bn(x, w, scale, shift, *, stride, pad, relu=True):
    """KxK (3x3 / 7x7) conv + folded BN + ReLU.

    The spatial conv runs on XLA's native conv (bf16 inputs, fp32 accum) to
    avoid materializing kh*kw x im2col copies in HBM; the BN/ReLU epilogue is
    a tiled Pallas kernel."""
    # TODO(synk): spatial conv itself stays on lax.conv_general_dilated (perf
    # review option b); only 1x1 convs / FC hit the Pallas MXU matmul kernel.
    y = lax.conv_general_dilated(
        x.astype(jnp.bfloat16), w.astype(jnp.bfloat16),
        window_strides=(stride, stride),
        padding=[(pad, pad), (pad, pad)],
        dimension_numbers=('NHWC', 'HWIO', 'NHWC'),
        preferred_element_type=jnp.float32)
    return scale_shift_act(y, scale, shift, relu)


def maxpool2d(x, ksize=3, stride=2, pad=1):
    """3x3 s2 maxpool (stem), tiled over output rows."""
    B, H, W, C = x.shape
    patches, OH, OW = _im2col(x, ksize, ksize, stride, pad, fill=-1e30)
    M = B * OH * OW
    kk = ksize * ksize
    p2 = patches.reshape(M, kk, C)
    TR = min(512, _round_up(M, 8))
    Mp = _round_up(M, TR)
    if Mp != M:
        p2 = jnp.pad(p2, ((0, Mp - M), (0, 0), (0, 0)))
    out = pl.pallas_call(
        partial(_maxpool_kernel, kk=kk),
        out_shape=jax.ShapeDtypeStruct((Mp, C), x.dtype),
        grid=(Mp // TR,),
        in_specs=[pl.BlockSpec((TR, kk, C), lambda i: (i, 0, 0))],
        out_specs=pl.BlockSpec((TR, C), lambda i: (i, 0)),
        compiler_params=pltpu.CompilerParams(
            dimension_semantics=("parallel",)),
    )(p2)
    if Mp != M:
        out = out[:M]
    return out.reshape(B, OH, OW, C)


def gem_pool(x_nhwc, p):
    """GeneralizedMeanPoolingP: clamp(eps) ** p -> spatial mean -> ** (1/p)."""
    B, H, W, C = x_nhwc.shape
    HW = H * W
    x3 = x_nhwc.reshape(B, HW, C)
    TC = 256 if C % 256 == 0 else 128
    p_vec = jnp.broadcast_to(p.reshape(1, 1).astype(jnp.float32), (1, C))
    return pl.pallas_call(
        partial(_gem_kernel, eps=GEM_EPS, inv_hw=1.0 / HW),
        out_shape=jax.ShapeDtypeStruct((B, C), jnp.float32),
        grid=(C // TC,),
        in_specs=[pl.BlockSpec((B, HW, TC), lambda c: (0, 0, c)),
                  pl.BlockSpec((1, TC), lambda c: (0, c))],
        out_specs=pl.BlockSpec((B, TC), lambda c: (0, c)),
        compiler_params=pltpu.CompilerParams(
            dimension_semantics=("parallel",)),
    )(x3, p_vec)


# ------------------------- Parameter init (ResNet-style, deterministic) -------------------------

class KeyGen:
    def __init__(self, key):
        self.key = key
        self.i = 0

    def __call__(self):
        k = jax.random.fold_in(self.key, self.i)
        self.i += 1
        return k


def make_conv(key, kh, kw, cin, cout):
    std = math.sqrt(2.0 / (kh * kw * cout))      # ResNet init: N(0, sqrt(2/fan_out))
    return std * jax.random.normal(key, (kh, kw, cin, cout), jnp.float32)


def make_bn(cout):
    gamma = jnp.ones((cout,), jnp.float32)       # zero_init_final_gamma = False
    beta = jnp.zeros((cout,), jnp.float32)
    mean = jnp.zeros((cout,), jnp.float32)       # default running stats (eval mode)
    var = jnp.ones((cout,), jnp.float32)
    scale = gamma / jnp.sqrt(var + BN_EPS)
    shift = beta - mean * scale
    return scale, shift


def init_bottleneck(kg, w_in, w_out, stride, w_b):
    p = {'stride': stride}
    p['a_w'] = make_conv(kg(), 1, 1, w_in, w_b)
    p['a_bn'] = make_bn(w_b)
    p['b_w'] = make_conv(kg(), 3, 3, w_b, w_b)
    p['b_bn'] = make_bn(w_b)
    p['c_w'] = make_conv(kg(), 1, 1, w_b, w_out)
    p['c_bn'] = make_bn(w_out)
    if w_in != w_out or stride != 1:
        p['proj_w'] = make_conv(kg(), 1, 1, w_in, w_out)
        p['proj_bn'] = make_bn(w_out)
    return p


def init_stage(kg, w_in, w_out, stride, d, w_b):
    blocks = []
    for i in range(d):
        b_stride = stride if i == 0 else 1
        b_w_in = w_in if i == 0 else w_out
        blocks.append(init_bottleneck(kg, b_w_in, w_out, b_stride, w_b))
    return blocks


def init_resnet(key, nc=REDUCTION_DIM):
    kg = KeyGen(key)
    d1, d2, d3, d4 = (3, 4, 6, 3)                 # DEPTH = 50
    g, gw = 1, 64
    w_b = gw * g
    params = {}
    params['stem_w'] = make_conv(kg(), 7, 7, 3, 64)
    params['stem_bn'] = make_bn(64)
    params['s1'] = init_stage(kg, 64, 256, 1, d1, w_b)
    params['s2'] = init_stage(kg, 256, 512, 2, d2, w_b * 2)
    params['s3'] = init_stage(kg, 512, 1024, 2, d3, w_b * 4)
    params['s4'] = init_stage(kg, 1024, 2048, 2, d4, w_b * 8)
    params['gem_p'] = jnp.array([GEM_P], jnp.float32)          # GeneralizedMeanPoolingP.p
    params['fc_w'] = 0.01 * jax.random.normal(kg(), (2048, nc), jnp.float32)
    params['fc_b'] = jnp.zeros((nc,), jnp.float32)
    return params


# ------------------------- Forward pass -------------------------

def bottleneck_forward(x, p):
    s = p['stride']
    # cfg.RESNET.STRIDE_1X1 = False -> (s1, s3) = (1, stride)
    h = conv1x1_bn(x, p['a_w'], *p['a_bn'], relu=True)
    h = conv_spatial_bn(h, p['b_w'], *p['b_bn'], stride=s, pad=1, relu=True)
    if 'proj_w' in p:
        sc = conv1x1_bn(x, p['proj_w'], *p['proj_bn'], stride=s, relu=False)
    else:
        sc = x
    # final 1x1 conv: BN + residual add + ReLU fused into the matmul epilogue
    return conv1x1_bn(h, p['c_w'], *p['c_bn'], relu=True, residual=sc)


def resnet_forward(params, x_nchw):
    x = jnp.transpose(x_nchw, (0, 2, 3, 1))                       # NCHW -> NHWC
    # stem: 7x7 s2, BN, ReLU, maxpool 3x3 s2
    x = conv_spatial_bn(x, params['stem_w'], *params['stem_bn'],
                        stride=2, pad=3, relu=True)
    x = maxpool2d(x)
    for blk in params['s1']:
        x = bottleneck_forward(x, blk)
    for blk in params['s2']:
        x = bottleneck_forward(x, blk)
    for blk in params['s3']:
        x = bottleneck_forward(x, blk)
    x3 = x
    for blk in params['s4']:
        x = bottleneck_forward(x, blk)
    pooled = gem_pool(x, params['gem_p'])                         # (B, 2048) fp32
    ones = jnp.ones((params['fc_w'].shape[1],), jnp.float32)
    feat = matmul_bn_act(pooled, params['fc_w'], ones, params['fc_b'],
                         relu=False, out_dtype=jnp.float32)       # Linear(2048, nc)
    x3_nchw = jnp.transpose(x3, (0, 3, 1, 2)).astype(jnp.float32)  # back to NCHW
    return feat, x3_nchw


if __name__ == "__main__":
    key = jax.random.PRNGKey(0)
    pkey, xkey = jax.random.split(key)
    params = init_resnet(pkey)
    x = jax.random.normal(xkey, (2, 3, 32, 32), jnp.float32)      # small NCHW input
    feat, x3 = resnet_forward(params, x)
    jax.block_until_ready((feat, x3))
    assert feat.shape == (2, REDUCTION_DIM), feat.shape
    assert x3.shape == (2, 1024, 2, 2), x3.shape
    print("KERNEL_OK")
</pallas_src>

<mosaic_0001>
module attributes {stable_mosaic.version = 11 : i64} {
  func.func @_scale_shift_act_kernel(%arg0: i32, %arg1: memref<512x64xf32, #tpu.memory_space<vmem>>, %arg2: memref<1x64xf32, #tpu.memory_space<vmem>>, %arg3: memref<1x64xf32, #tpu.memory_space<vmem>>, %arg4: memref<512x64xbf16, #tpu.memory_space<vmem>>) attributes {dimension_semantics = [#tpu.dimension_semantics<parallel>], iteration_bounds = array<i64: 1>, scalar_prefetch = 0 : i64, scratch_operands = 0 : i64, tpu.core_type = #tpu.core_type<tc>, window_params = [{transform_indices = @transform_0, window_bounds = array<i64: 512, 64>}, {pipeline_mode = #tpu.pipeline_mode<synchronous>, transform_indices = @transform_1, window_bounds = array<i64: 1, 64>}, {pipeline_mode = #tpu.pipeline_mode<synchronous>, transform_indices = @transform_2, window_bounds = array<i64: 1, 64>}, {transform_indices = @transform_3, window_bounds = array<i64: 512, 64>}]} {
    %c0 = arith.constant 0 : index
    %c0_0 = arith.constant 0 : index
    %0 = vector.load %arg1[%c0, %c0_0] : memref<512x64xf32, #tpu.memory_space<vmem>>, vector<512x64xf32>
    %c0_1 = arith.constant 0 : index
    %c0_2 = arith.constant 0 : index
    %1 = vector.load %arg2[%c0_1, %c0_2] : memref<1x64xf32, #tpu.memory_space<vmem>>, vector<1x64xf32>
    %2 = vector.broadcast %1 : vector<1x64xf32> to vector<512x64xf32>
    %3 = arith.mulf %0, %2 : vector<512x64xf32>
    %c0_3 = arith.constant 0 : index
    %c0_4 = arith.constant 0 : index
    %4 = vector.load %arg3[%c0_3, %c0_4] : memref<1x64xf32, #tpu.memory_space<vmem>>, vector<1x64xf32>
    %5 = vector.broadcast %4 : vector<1x64xf32> to vector<512x64xf32>
    %6 = arith.addf %3, %5 : vector<512x64xf32>
    %cst = arith.constant 0.000000e+00 : f32
    %7 = vector.broadcast %cst : f32 to vector<512x64xf32>
    %8 = arith.maximumf %6, %7 : vector<512x64xf32>
    %9 = arith.truncf %8 : vector<512x64xf32> to vector<512x64xbf16>
    %c0_5 = arith.constant 0 : index
    %c0_6 = arith.constant 0 : index
    %10 = vector.load %arg4[%c0_5, %c0_6] : memref<512x64xbf16, #tpu.memory_space<vmem>>, vector<512x64xbf16>
    tpu.vector_store %arg4[%c0_5, %c0_6], %9 {strides = array<i32>} : memref<512x64xbf16, #tpu.memory_space<vmem>>, vector<512x64xbf16>,
    return
  }
  func.func @transform_0(%arg0: i32) -> (i32, i32) {
    %c0_i32 = arith.constant 0 : i32
    %c0_i32_0 = arith.constant 0 : i32
    return %arg0, %c0_i32 : i32, i32
  }
  func.func @transform_1(%arg0: i32) -> (i32, i32) {
    %c0_i32 = arith.constant 0 : i32
    %c0_i32_0 = arith.constant 0 : i32
    %c0_i32_1 = arith.constant 0 : i32
    return %c0_i32, %c0_i32_0 : i32, i32
  }
  func.func @transform_2(%arg0: i32) -> (i32, i32) {
    %c0_i32 = arith.constant 0 : i32
    %c0_i32_0 = arith.constant 0 : i32
    %c0_i32_1 = arith.constant 0 : i32
    return %c0_i32, %c0_i32_0 : i32, i32
  }
  func.func @transform_3(%arg0: i32) -> (i32, i32) {
    %c0_i32 = arith.constant 0 : i32
    %c0_i32_0 = arith.constant 0 : i32
    return %arg0, %c0_i32 : i32, i32
  }
}

</mosaic_0001>

<llo_original>
// kernel: tpu_custom_call.1
$region0: #{tpu_custom_call.1}
  #allocation0 [shape = 'u32[]', space=smem, size = 0x4, offset = 0x4, fixed_abs, tag = 'smem constant byte address 0x4 - core index']
  #allocation1 [shape = 'u32[144,128]{1,0:T(1,128)}', space=vmem, size = 0x12000, scoped, tag = 'internal scratch']
  %s0 = inlined_call_operand.vmem [shape: f32[512,64], index: 0, kind: input, shape index: {}]
  %s1 = inlined_call_operand.vmem [shape: f32[1,64], index: 1, kind: input, shape index: {}]
  %s2 = inlined_call_operand.vmem [shape: f32[1,64], index: 2, kind: input, shape index: {}]
  %s3 = inlined_call_operand.vmem [shape: bf16[512,64], index: 3, kind: output, shape index: {}]
  %s4 = sld [smem:[#allocation0]]
  $region22: #{tpu_custom_call.1} parent=0
    _
  %s6 = ssub.s32 1, %s4
  %s7 = scalar_select 0, %s6, %s4
  // Predicated region
  $region2: #{tpu_custom_call.1} parent=0 // pred_check
    _
  $region3: #{tpu_custom_call.1} parent=0 // pred_check_branch
    %9 = sbr.rel (0) target = $region5
  $region4: #{tpu_custom_call.1} parent=0 // pred_region
    _
  $region5: #{tpu_custom_call.1} parent=0 // pred_fallthru
    _
  // Predicated region
  $region6: #{tpu_custom_call.1} parent=0 // pred_check
    _
  $region7: #{tpu_custom_call.1} parent=0 // pred_check_branch
    %11 = sbr.rel (0) target = $region9
  $region8: #{tpu_custom_call.1} parent=0 // pred_region
    _
  $region9: #{tpu_custom_call.1} parent=0 // pred_fallthru
    _
  // Predicated region
  $region10: #{tpu_custom_call.1} parent=0 // pred_check
    _
  $region11: #{tpu_custom_call.1} parent=0 // pred_check_branch
    %13 = sbr.rel (0) target = $region13
  $region12: #{tpu_custom_call.1} parent=0 // pred_region
    _
  $region13: #{tpu_custom_call.1} parent=0 // pred_fallthru
    _
  %v14 = vld [vmem:[%s0] sm:$0xff]
  %v15 = vld [vmem:[%s0 + $0x8] sm:$0xff]
  %v16 = vld [vmem:[%s0 + $0x10] sm:$0xff]
  %v17 = vld [vmem:[%s0 + $0x18] sm:$0xff]
  %v18 = vld [vmem:[%s0 + $0x20] sm:$0xff]
  %v19 = vld [vmem:[%s0 + $0x28] sm:$0xff]
  %v20 = vld [vmem:[%s0 + $0x30] sm:$0xff]
  %v21 = vld [vmem:[%s0 + $0x38] sm:$0xff]
  %v22 = vld [vmem:[%s0 + $0x40] sm:$0xff]
  %v23 = vld [vmem:[%s0 + $0x48] sm:$0xff]
  %v24 = vld [vmem:[%s0 + $0x50] sm:$0xff]
  %v25 = vld [vmem:[%s0 + $0x58] sm:$0xff]
  %v26 = vld [vmem:[%s0 + $0x60] sm:$0xff]
  %v27 = vld [vmem:[%s0 + $0x68] sm:$0xff]
  %v28 = vld [vmem:[%s0 + $0x70] sm:$0xff]
  %v29 = vld [vmem:[%s0 + $0x78] sm:$0xff]
  %v30 = vld [vmem:[%s0 + $0x80] sm:$0xff]
  %v31 = vld [vmem:[%s0 + $0x88] sm:$0xff]
  %v32 = vld [vmem:[%s0 + $0x90] sm:$0xff]
  %v33 = vld [vmem:[%s0 + $0x98] sm:$0xff]
  %v34 = vld [vmem:[%s0 + $0xa0] sm:$0xff]
  %v35 = vld [vmem:[%s0 + $0xa8] sm:$0xff]
  %v36 = vld [vmem:[%s0 + $0xb0] sm:$0xff]
  %v37 = vld [vmem:[%s0 + $0xb8] sm:$0xff]
  %v38 = vld [vmem:[%s0 + $0xc0] sm:$0xff]
  %v39 = vld [vmem:[%s0 + $0xc8] sm:$0xff]
  %v40 = vld [vmem:[%s0 + $0xd0] sm:$0xff]
  %v41 = vld [vmem:[%s0 + $0xd8] sm:$0xff]
  %v42 = vld [vmem:[%s0 + $0xe0] sm:$0xff]
  %v43 = vld [vmem:[%s0 + $0xe8] sm:$0xff]
  %v44 = vld [vmem:[%s0 + $0xf0] sm:$0xff]
  %v45 = vld [vmem:[%s0 + $0xf8] sm:$0xff]
  %v46 = vld [vmem:[%s0 + $0x100] sm:$0xff]
  %v47 = vld [vmem:[%s0 + $0x108] sm:$0xff]
  %v48 = vld [vmem:[%s0 + $0x110] sm:$0xff]
  %v49 = vld [vmem:[%s0 + $0x118] sm:$0xff]
  %v50 = vld [vmem:[%s0 + $0x120] sm:$0xff]
  %v51 = vld [vmem:[%s0 + $0x128] sm:$0xff]
  %v52 = vld [vmem:[%s0 + $0x130] sm:$0xff]
  %v53 = vld [vmem:[%s0 + $0x138] sm:$0xff]
  %v54 = vld [vmem:[%s0 + $0x140] sm:$0xff]
  %v55 = vld [vmem:[%s0 + $0x148] sm:$0xff]
  %v56 = vld [vmem:[%s0 + $0x150] sm:$0xff]
  %v57 = vld [vmem:[%s0 + $0x158] sm:$0xff]
  %v58 = vld [vmem:[%s0 + $0x160] sm:$0xff]
  %v59 = vld [vmem:[%s0 + $0x168] sm:$0xff]
  %v60 = vld [vmem:[%s0 + $0x170] sm:$0xff]
  %v61 = vld [vmem:[%s0 + $0x178] sm:$0xff]
  %v62 = vld [vmem:[%s0 + $0x180] sm:$0xff]
  %v63 = vld [vmem:[%s0 + $0x188] sm:$0xff]
  %v64 = vld [vmem:[%s0 + $0x190] sm:$0xff]
  %v65 = vld [vmem:[%s0 + $0x198] sm:$0xff]
  %v66 = vld [vmem:[%s0 + $0x1a0] sm:$0xff]
  %v67 = vld [vmem:[%s0 + $0x1a8] sm:$0xff]
  %v68 = vld [vmem:[%s0 + $0x1b0] sm:$0xff]
  %v69 = vld [vmem:[%s0 + $0x1b8] sm:$0xff]
  %v70 = vld [vmem:[%s0 + $0x1c0] sm:$0xff]
  %v71 = vld [vmem:[%s0 + $0x1c8] sm:$0xff]
  %v72 = vld [vmem:[%s0 + $0x1d0] sm:$0xff]
  %v73 = vld [vmem:[%s0 + $0x1d8] sm:$0xff]
  %v74 = vld [vmem:[%s0 + $0x1e0] sm:$0xff]
  %v75 = vld [vmem:[%s0 + $0x1e8] sm:$0xff]
  %v76 = vld [vmem:[%s0 + $0x1f0] sm:$0xff]
  %v77 = vld [vmem:[%s0 + $0x1f8] sm:$0xff]
  %v78 = vld [vmem:[%s1] sm:$0x1]
  %v80 = vlaneseq
  %v81 = vshrl.u32 %v80, 7
  %v82 = vsub.s32 0, %v81
  %v83 = vrot.slane %v78, %v82
  %v85 = vmul.f32 %v14, %v83
  %v86 = vmul.f32 %v15, %v83
  %v87 = vmul.f32 %v16, %v83
  %v88 = vmul.f32 %v17, %v83
  %v89 = vmul.f32 %v18, %v83
  %v90 = vmul.f32 %v19, %v83
  %v91 = vmul.f32 %v20, %v83
  %v92 = vmul.f32 %v21, %v83
  %v93 = vmul.f32 %v22, %v83
  %v94 = vmul.f32 %v23, %v83
  %v95 = vmul.f32 %v24, %v83
  %v96 = vmul.f32 %v25, %v83
  %v97 = vmul.f32 %v26, %v83
  %v98 = vmul.f32 %v27, %v83
  %v99 = vmul.f32 %v28, %v83
  %v100 = vmul.f32 %v29, %v83
  %v101 = vmul.f32 %v30, %v83
  %v102 = vmul.f32 %v31, %v83
  %v103 = vmul.f32 %v32, %v83
  %v104 = vmul.f32 %v33, %v83
  %v105 = vmul.f32 %v34, %v83
  %v106 = vmul.f32 %v35, %v83
  %v107 = vmul.f32 %v36, %v83
  %v108 = vmul.f32 %v37, %v83
  %v109 = vmul.f32 %v38, %v83
  %v110 = vmul.f32 %v39, %v83
  %v111 = vmul.f32 %v40, %v83
  %v112 = vmul.f32 %v41, %v83
  %v113 = vmul.f32 %v42, %v83
  %v114 = vmul.f32 %v43, %v83
  %v115 = vmul.f32 %v44, %v83
  %v116 = vmul.f32 %v45, %v83
  %v117 = vmul.f32 %v46, %v83
  %v118 = vmul.f32 %v47, %v83
  %v119 = vmul.f32 %v48, %v83
  %v120 = vmul.f32 %v49, %v83
  %v121 = vmul.f32 %v50, %v83
  %v122 = vmul.f32 %v51, %v83
  %v123 = vmul.f32 %v52, %v83
  %v124 = vmul.f32 %v53, %v83
  %v125 = vmul.f32 %v54, %v83
  %v126 = vmul.f32 %v55, %v83
  %v127 = vmul.f32 %v56, %v83
  %v128 = vmul.f32 %v57, %v83
  %v129 = vmul.f32 %v58, %v83
  %v130 = vmul.f32 %v59, %v83
  %v131 = vmul.f32 %v60, %v83
  %v132 = vmul.f32 %v61, %v83
  %v133 = vmul.f32 %v62, %v83
  %v134 = vmul.f32 %v63, %v83
  %v135 = vmul.f32 %v64, %v83
  %v136 = vmul.f32 %v65, %v83
  %v137 = vmul.f32 %v66, %v83
  %v138 = vmul.f32 %v67, %v83
  %v139 = vmul.f32 %v68, %v83
  %v140 = vmul.f32 %v69, %v83
  %v141 = vmul.f32 %v70, %v83
  %v142 = vmul.f32 %v71, %v83
  %v143 = vmul.f32 %v72, %v83
  %v144 = vmul.f32 %v73, %v83
  %v145 = vmul.f32 %v74, %v83
  %v146 = vmul.f32 %v75, %v83
  %v147 = vmul.f32 %v76, %v83
  %v148 = vmul.f32 %v77, %v83
  %v149 = vld [vmem:[%s2] sm:$0x1]
  %v151 = vlaneseq
  %v152 = vshrl.u32 %v151, 7
  %v153 = vsub.s32 0, %v152
  %v154 = vrot.slane %v149, %v153
  %v156 = vadd.f32 %v85, %v154
  %v157 = vadd.f32 %v86, %v154
  %v158 = vadd.f32 %v87, %v154
  %v159 = vadd.f32 %v88, %v154
  %v160 = vadd.f32 %v89, %v154
  %v161 = vadd.f32 %v90, %v154
  %v162 = vadd.f32 %v91, %v154
  %v163 = vadd.f32 %v92, %v154
  %v164 = vadd.f32 %v93, %v154
  %v165 = vadd.f32 %v94, %v154
  %v166 = vadd.f32 %v95, %v154
  %v167 = vadd.f32 %v96, %v154
  %v168 = vadd.f32 %v97, %v154
  %v169 = vadd.f32 %v98, %v154
  %v170 = vadd.f32 %v99, %v154
  %v171 = vadd.f32 %v100, %v154
  %v172 = vadd.f32 %v101, %v154
  %v173 = vadd.f32 %v102, %v154
  %v174 = vadd.f32 %v103, %v154
  %v175 = vadd.f32 %v104, %v154
  %v176 = vadd.f32 %v105, %v154
  %v177 = vadd.f32 %v106, %v154
  %v178 = vadd.f32 %v107, %v154
  %v179 = vadd.f32 %v108, %v154
  %v180 = vadd.f32 %v109, %v154
  %v181 = vadd.f32 %v110, %v154
  %v182 = vadd.f32 %v111, %v154
  %v183 = vadd.f32 %v112, %v154
  %v184 = vadd.f32 %v113, %v154
  %v185 = vadd.f32 %v114, %v154
  %v186 = vadd.f32 %v115, %v154
  %v187 = vadd.f32 %v116, %v154
  %v188 = vadd.f32 %v117, %v154
  %v189 = vadd.f32 %v118, %v154
  %v190 = vadd.f32 %v119, %v154
  %v191 = vadd.f32 %v120, %v154
  %v192 = vadd.f32 %v121, %v154
  %v193 = vadd.f32 %v122, %v154
  %v194 = vadd.f32 %v123, %v154
  %v195 = vadd.f32 %v124, %v154
  %v196 = vadd.f32 %v125, %v154
  %v197 = vadd.f32 %v126, %v154
  %v198 = vadd.f32 %v127, %v154
  %v199 = vadd.f32 %v128, %v154
  %v200 = vadd.f32 %v129, %v154
  %v201 = vadd.f32 %v130, %v154
  %v202 = vadd.f32 %v131, %v154
  %v203 = vadd.f32 %v132, %v154
  %v204 = vadd.f32 %v133, %v154
  %v205 = vadd.f32 %v134, %v154
  %v206 = vadd.f32 %v135, %v154
  %v207 = vadd.f32 %v136, %v154
  %v208 = vadd.f32 %v137, %v154
  %v209 = vadd.f32 %v138, %v154
  %v210 = vadd.f32 %v139, %v154
  %v211 = vadd.f32 %v140, %v154
  %v212 = vadd.f32 %v141, %v154
  %v213 = vadd.f32 %v142, %v154
  %v214 = vadd.f32 %v143, %v154
  %v215 = vadd.f32 %v144, %v154
  %v216 = vadd.f32 %v145, %v154
  %v217 = vadd.f32 %v146, %v154
  %v218 = vadd.f32 %v147, %v154
  %v219 = vadd.f32 %v148, %v154
  %v220 = vmax.f32 %v156, 0.0
  %v221 = vmax.f32 %v157, 0.0
  %v222 = vmax.f32 %v158, 0.0
  %v223 = vmax.f32 %v159, 0.0
  %v224 = vmax.f32 %v160, 0.0
  %v225 = vmax.f32 %v161, 0.0
  %v226 = vmax.f32 %v162, 0.0
  %v227 = vmax.f32 %v163, 0.0
  %v228 = vmax.f32 %v164, 0.0
  %v229 = vmax.f32 %v165, 0.0
  %v230 = vmax.f32 %v166, 0.0
  %v231 = vmax.f32 %v167, 0.0
  %v232 = vmax.f32 %v168, 0.0
  %v233 = vmax.f32 %v169, 0.0
  %v234 = vmax.f32 %v170, 0.0
  %v235 = vmax.f32 %v171, 0.0
  %v236 = vmax.f32 %v172, 0.0
  %v237 = vmax.f32 %v173, 0.0
  %v238 = vmax.f32 %v174, 0.0
  %v239 = vmax.f32 %v175, 0.0
  %v240 = vmax.f32 %v176, 0.0
  %v241 = vmax.f32 %v177, 0.0
  %v242 = vmax.f32 %v178, 0.0
  %v243 = vmax.f32 %v179, 0.0
  %v244 = vmax.f32 %v180, 0.0
  %v245 = vmax.f32 %v181, 0.0
  %v246 = vmax.f32 %v182, 0.0
  %v247 = vmax.f32 %v183, 0.0
  %v248 = vmax.f32 %v184, 0.0
  %v249 = vmax.f32 %v185, 0.0
  %v250 = vmax.f32 %v186, 0.0
  %v251 = vmax.f32 %v187, 0.0
  %v252 = vmax.f32 %v188, 0.0
  %v253 = vmax.f32 %v189, 0.0
  %v254 = vmax.f32 %v190, 0.0
  %v255 = vmax.f32 %v191, 0.0
  %v256 = vmax.f32 %v192, 0.0
  %v257 = vmax.f32 %v193, 0.0
  %v258 = vmax.f32 %v194, 0.0
  %v259 = vmax.f32 %v195, 0.0
  %v260 = vmax.f32 %v196, 0.0
  %v261 = vmax.f32 %v197, 0.0
  %v262 = vmax.f32 %v198, 0.0
  %v263 = vmax.f32 %v199, 0.0
  %v264 = vmax.f32 %v200, 0.0
  %v265 = vmax.f32 %v201, 0.0
  %v266 = vmax.f32 %v202, 0.0
  %v267 = vmax.f32 %v203, 0.0
  %v268 = vmax.f32 %v204, 0.0
  %v269 = vmax.f32 %v205, 0.0
  %v270 = vmax.f32 %v206, 0.0
  %v271 = vmax.f32 %v207, 0.0
  %v272 = vmax.f32 %v208, 0.0
  %v273 = vmax.f32 %v209, 0.0
  %v274 = vmax.f32 %v210, 0.0
  %v275 = vmax.f32 %v211, 0.0
  %v276 = vmax.f32 %v212, 0.0
  %v277 = vmax.f32 %v213, 0.0
  %v278 = vmax.f32 %v214, 0.0
  %v279 = vmax.f32 %v215, 0.0
  %v280 = vmax.f32 %v216, 0.0
  %v281 = vmax.f32 %v217, 0.0
  %v282 = vmax.f32 %v218, 0.0
  %v283 = vmax.f32 %v219, 0.0
  %v284 = vpack.c.bf16 %v221, %v220
  %v285 = vpack.c.bf16 %v223, %v222
  %v286 = vpack.c.bf16 %v225, %v224
  %v287 = vpack.c.bf16 %v227, %v226
  %v288 = vpack.c.bf16 %v229, %v228
  %v289 = vpack.c.bf16 %v231, %v230
  %v290 = vpack.c.bf16 %v233, %v232
  %v291 = vpack.c.bf16 %v235, %v234
  %v292 = vpack.c.bf16 %v237, %v236
  %v293 = vpack.c.bf16 %v239, %v238
  %v294 = vpack.c.bf16 %v241, %v240
  %v295 = vpack.c.bf16 %v243, %v242
  %v296 = vpack.c.bf16 %v245, %v244
  %v297 = vpack.c.bf16 %v247, %v246
  %v298 = vpack.c.bf16 %v249, %v248
  %v299 = vpack.c.bf16 %v251, %v250
  %v300 = vpack.c.bf16 %v253, %v252
  %v301 = vpack.c.bf16 %v255, %v254
  %v302 = vpack.c.bf16 %v257, %v256
  %v303 = vpack.c.bf16 %v259, %v258
  %v304 = vpack.c.bf16 %v261, %v260
  %v305 = vpack.c.bf16 %v263, %v262
  %v306 = vpack.c.bf16 %v265, %v264
  %v307 = vpack.c.bf16 %v267, %v266
  %v308 = vpack.c.bf16 %v269, %v268
  %v309 = vpack.c.bf16 %v271, %v270
  %v310 = vpack.c.bf16 %v273, %v272
  %v311 = vpack.c.bf16 %v275, %v274
  %v312 = vpack.c.bf16 %v277, %v276
  %v313 = vpack.c.bf16 %v279, %v278
  %v314 = vpack.c.bf16 %v281, %v280
  %v315 = vpack.c.bf16 %v283, %v282
  %v348 = vunpack.c.l.b16 %v284
  %v349 = vunpack.c.h.b16 %v284
  %v350 = vunpack.c.l.b16 %v285
  %v351 = vunpack.c.h.b16 %v285
  %v352 = vunpack.c.l.b16 %v286
  %v353 = vunpack.c.h.b16 %v286
  %v354 = vunpack.c.l.b16 %v287
  %v355 = vunpack.c.h.b16 %v287
  %v356 = vunpack.c.l.b16 %v288
  %v357 = vunpack.c.h.b16 %v288
  %v358 = vunpack.c.l.b16 %v289
  %v359 = vunpack.c.h.b16 %v289
  %v360 = vunpack.c.l.b16 %v290
  %v361 = vunpack.c.h.b16 %v290
  %v362 = vunpack.c.l.b16 %v291
  %v363 = vunpack.c.h.b16 %v291
  %v364 = vunpack.c.l.b16 %v292
  %v365 = vunpack.c.h.b16 %v292
  %v366 = vunpack.c.l.b16 %v293
  %v367 = vunpack.c.h.b16 %v293
  %v368 = vunpack.c.l.b16 %v294
  %v369 = vunpack.c.h.b16 %v294
  %v370 = vunpack.c.l.b16 %v295
  %v371 = vunpack.c.h.b16 %v295
  %v372 = vunpack.c.l.b16 %v296
  %v373 = vunpack.c.h.b16 %v296
  %v374 = vunpack.c.l.b16 %v297
  %v375 = vunpack.c.h.b16 %v297
  %v376 = vunpack.c.l.b16 %v298
  %v377 = vunpack.c.h.b16 %v298
  %v378 = vunpack.c.l.b16 %v299
  %v379 = vunpack.c.h.b16 %v299
  %v380 = vunpack.c.l.b16 %v300
  %v381 = vunpack.c.h.b16 %v300
  %v382 = vunpack.c.l.b16 %v301
  %v383 = vunpack.c.h.b16 %v301
  %v384 = vunpack.c.l.b16 %v302
  %v385 = vunpack.c.h.b16 %v302
  %v386 = vunpack.c.l.b16 %v303
  %v387 = vunpack.c.h.b16 %v303
  %v388 = vunpack.c.l.b16 %v304
  %v389 = vunpack.c.h.b16 %v304
  %v390 = vunpack.c.l.b16 %v305
  %v391 = vunpack.c.h.b16 %v305
  %v392 = vunpack.c.l.b16 %v306
  %v393 = vunpack.c.h.b16 %v306
  %v394 = vunpack.c.l.b16 %v307
  %v395 = vunpack.c.h.b16 %v307
  %v396 = vunpack.c.l.b16 %v308
  %v397 = vunpack.c.h.b16 %v308
  %v398 = vunpack.c.l.b16 %v309
  %v399 = vunpack.c.h.b16 %v309
  %v400 = vunpack.c.l.b16 %v310
  %v401 = vunpack.c.h.b16 %v310
  %v402 = vunpack.c.l.b16 %v311
  %v403 = vunpack.c.h.b16 %v311
  %v404 = vunpack.c.l.b16 %v312
  %v405 = vunpack.c.h.b16 %v312
  %v406 = vunpack.c.l.b16 %v313
  %v407 = vunpack.c.h.b16 %v313
  %v408 = vunpack.c.l.b16 %v314
  %v409 = vunpack.c.h.b16 %v314
  %v410 = vunpack.c.l.b16 %v315
  %v411 = vunpack.c.h.b16 %v315
  %v412 = vpack.c.b16 %v348, %v348
  %v413 = vpack.c.b16 %v349, %v349
  %v414 = vpack.c.b16 %v350, %v350
  %v415 = vpack.c.b16 %v351, %v351
  %v416 = vpack.c.b16 %v352, %v352
  %v417 = vpack.c.b16 %v353, %v353
  %v418 = vpack.c.b16 %v354, %v354
  %v419 = vpack.c.b16 %v355, %v355
  %v420 = vpack.c.b16 %v356, %v356
  %v421 = vpack.c.b16 %v357, %v357
  %v422 = vpack.c.b16 %v358, %v358
  %v423 = vpack.c.b16 %v359, %v359
  %v424 = vpack.c.b16 %v360, %v360
  %v425 = vpack.c.b16 %v361, %v361
  %v426 = vpack.c.b16 %v362, %v362
  %v427 = vpack.c.b16 %v363, %v363
  %v428 = vpack.c.b16 %v364, %v364
  %v429 = vpack.c.b16 %v365, %v365
  %v430 = vpack.c.b16 %v366, %v366
  %v431 = vpack.c.b16 %v367, %v367
  %v432 = vpack.c.b16 %v368, %v368
  %v433 = vpack.c.b16 %v369, %v369
  %v434 = vpack.c.b16 %v370, %v370
  %v435 = vpack.c.b16 %v371, %v371
  %v436 = vpack.c.b16 %v372, %v372
  %v437 = vpack.c.b16 %v373, %v373
  %v438 = vpack.c.b16 %v374, %v374
  %v439 = vpack.c.b16 %v375, %v375
  %v440 = vpack.c.b16 %v376, %v376
  %v441 = vpack.c.b16 %v377, %v377
  %v442 = vpack.c.b16 %v378, %v378
  %v443 = vpack.c.b16 %v379, %v379
  %v444 = vpack.c.b16 %v380, %v380
  %v445 = vpack.c.b16 %v381, %v381
  %v446 = vpack.c.b16 %v382, %v382
  %v447 = vpack.c.b16 %v383, %v383
  %v448 = vpack.c.b16 %v384, %v384
  %v449 = vpack.c.b16 %v385, %v385
  %v450 = vpack.c.b16 %v386, %v386
  %v451 = vpack.c.b16 %v387, %v387
  %v452 = vpack.c.b16 %v388, %v388
  %v453 = vpack.c.b16 %v389, %v389
  %v454 = vpack.c.b16 %v390, %v390
  %v455 = vpack.c.b16 %v391, %v391
  %v456 = vpack.c.b16 %v392, %v392
  %v457 = vpack.c.b16 %v393, %v393
  %v458 = vpack.c.b16 %v394, %v394
  %v459 = vpack.c.b16 %v395, %v395
  %v460 = vpack.c.b16 %v396, %v396
  %v461 = vpack.c.b16 %v397, %v397
  %v462 = vpack.c.b16 %v398, %v398
  %v463 = vpack.c.b16 %v399, %v399
  %v464 = vpack.c.b16 %v400, %v400
  %v465 = vpack.c.b16 %v401, %v401
  %v466 = vpack.c.b16 %v402, %v402
  %v467 = vpack.c.b16 %v403, %v403
  %v468 = vpack.c.b16 %v404, %v404
  %v469 = vpack.c.b16 %v405, %v405
  %v470 = vpack.c.b16 %v406, %v406
  %v471 = vpack.c.b16 %v407, %v407
  %v472 = vpack.c.b16 %v408, %v408
  %v473 = vpack.c.b16 %v409, %v409
  %v474 = vpack.c.b16 %v410, %v410
  %v475 = vpack.c.b16 %v411, %v411
  %vm540 = vcmask 519168
  %541 = vst.msk [vmem:[%s3] sm:$0xf] %vm540, %v412
  %542 = vst.msk [vmem:[%s3 + $0x4] sm:$0xf] %vm540, %v413
  %543 = vst.msk [vmem:[%s3 + $0x8] sm:$0xf] %vm540, %v414
  %544 = vst.msk [vmem:[%s3 + $0xc] sm:$0xf] %vm540, %v415
  %545 = vst.msk [vmem:[%s3 + $0x10] sm:$0xf] %vm540, %v416
  %546 = vst.msk [vmem:[%s3 + $0x14] sm:$0xf] %vm540, %v417
  %547 = vst.msk [vmem:[%s3 + $0x18] sm:$0xf] %vm540, %v418
  %548 = vst.msk [vmem:[%s3 + $0x1c] sm:$0xf] %vm540, %v419
  %549 = vst.msk [vmem:[%s3 + $0x20] sm:$0xf] %vm540, %v420
  %550 = vst.msk [vmem:[%s3 + $0x24] sm:$0xf] %vm540, %v421
  %551 = vst.msk [vmem:[%s3 + $0x28] sm:$0xf] %vm540, %v422
  %552 = vst.msk [vmem:[%s3 + $0x2c] sm:$0xf] %vm540, %v423
  %553 = vst.msk [vmem:[%s3 + $0x30] sm:$0xf] %vm540, %v424
  %554 = vst.msk [vmem:[%s3 + $0x34] sm:$0xf] %vm540, %v425
  %555 = vst.msk [vmem:[%s3 + $0x38] sm:$0xf] %vm540, %v426
  %556 = vst.msk [vmem:[%s3 + $0x3c] sm:$0xf] %vm540, %v427
  %557 = vst.msk [vmem:[%s3 + $0x40] sm:$0xf] %vm540, %v428
  %558 = vst.msk [vmem:[%s3 + $0x44] sm:$0xf] %vm540, %v429
  %559 = vst.msk [vmem:[%s3 + $0x48] sm:$0xf] %vm540, %v430
  %560 = vst.msk [vmem:[%s3 + $0x4c] sm:$0xf] %vm540, %v431
  %561 = vst.msk [vmem:[%s3 + $0x50] sm:$0xf] %vm540, %v432
  %562 = vst.msk [vmem:[%s3 + $0x54] sm:$0xf] %vm540, %v433
  %563 = vst.msk [vmem:[%s3 + $0x58] sm:$0xf] %vm540, %v434
  %564 = vst.msk [vmem:[%s3 + $0x5c] sm:$0xf] %vm540, %v435
  %565 = vst.msk [vmem:[%s3 + $0x60] sm:$0xf] %vm540, %v436
  %566 = vst.msk [vmem:[%s3 + $0x64] sm:$0xf] %vm540, %v437
  %567 = vst.msk [vmem:[%s3 + $0x68] sm:$0xf] %vm540, %v438
  %568 = vst.msk [vmem:[%s3 + $0x6c] sm:$0xf] %vm540, %v439
  %569 = vst.msk [vmem:[%s3 + $0x70] sm:$0xf] %vm540, %v440
  %570 = vst.msk [vmem:[%s3 + $0x74] sm:$0xf] %vm540, %v441
  %571 = vst.msk [vmem:[%s3 + $0x78] sm:$0xf] %vm540, %v442
  %572 = vst.msk [vmem:[%s3 + $0x7c] sm:$0xf] %vm540, %v443
  %573 = vst.msk [vmem:[%s3 + $0x80] sm:$0xf] %vm540, %v444
  %574 = vst.msk [vmem:[%s3 + $0x84] sm:$0xf] %vm540, %v445
  %575 = vst.msk [vmem:[%s3 + $0x88] sm:$0xf] %vm540, %v446
  %576 = vst.msk [vmem:[%s3 + $0x8c] sm:$0xf] %vm540, %v447
  %577 = vst.msk [vmem:[%s3 + $0x90] sm:$0xf] %vm540, %v448
  %578 = vst.msk [vmem:[%s3 + $0x94] sm:$0xf] %vm540, %v449
  %579 = vst.msk [vmem:[%s3 + $0x98] sm:$0xf] %vm540, %v450
  %580 = vst.msk [vmem:[%s3 + $0x9c] sm:$0xf] %vm540, %v451
  %581 = vst.msk [vmem:[%s3 + $0xa0] sm:$0xf] %vm540, %v452
  %582 = vst.msk [vmem:[%s3 + $0xa4] sm:$0xf] %vm540, %v453
  %583 = vst.msk [vmem:[%s3 + $0xa8] sm:$0xf] %vm540, %v454
  %584 = vst.msk [vmem:[%s3 + $0xac] sm:$0xf] %vm540, %v455
  %585 = vst.msk [vmem:[%s3 + $0xb0] sm:$0xf] %vm540, %v456
  %586 = vst.msk [vmem:[%s3 + $0xb4] sm:$0xf] %vm540, %v457
  %587 = vst.msk [vmem:[%s3 + $0xb8] sm:$0xf] %vm540, %v458
  %588 = vst.msk [vmem:[%s3 + $0xbc] sm:$0xf] %vm540, %v459
  %589 = vst.msk [vmem:[%s3 + $0xc0] sm:$0xf] %vm540, %v460
  %590 = vst.msk [vmem:[%s3 + $0xc4] sm:$0xf] %vm540, %v461
  %591 = vst.msk [vmem:[%s3 + $0xc8] sm:$0xf] %vm540, %v462
  %592 = vst.msk [vmem:[%s3 + $0xcc] sm:$0xf] %vm540, %v463
  %593 = vst.msk [vmem:[%s3 + $0xd0] sm:$0xf] %vm540, %v464
  %594 = vst.msk [vmem:[%s3 + $0xd4] sm:$0xf] %vm540, %v465
  %595 = vst.msk [vmem:[%s3 + $0xd8] sm:$0xf] %vm540, %v466
  %596 = vst.msk [vmem:[%s3 + $0xdc] sm:$0xf] %vm540, %v467
  %597 = vst.msk [vmem:[%s3 + $0xe0] sm:$0xf] %vm540, %v468
  %598 = vst.msk [vmem:[%s3 + $0xe4] sm:$0xf] %vm540, %v469
  %599 = vst.msk [vmem:[%s3 + $0xe8] sm:$0xf] %vm540, %v470
  %600 = vst.msk [vmem:[%s3 + $0xec] sm:$0xf] %vm540, %v471
  %601 = vst.msk [vmem:[%s3 + $0xf0] sm:$0xf] %vm540, %v472
  %602 = vst.msk [vmem:[%s3 + $0xf4] sm:$0xf] %vm540, %v473
  %603 = vst.msk [vmem:[%s3 + $0xf8] sm:$0xf] %vm540, %v474
  %604 = vst.msk [vmem:[%s3 + $0xfc] sm:$0xf] %vm540, %v475
  // Predicated region
  $region14: #{tpu_custom_call.1} parent=0 // pred_check
    _
  $region15: #{tpu_custom_call.1} parent=0 // pred_check_branch
    %606 = sbr.rel (0) target = $region17
  $region16: #{tpu_custom_call.1} parent=0 // pred_region
    _
  $region17: #{tpu_custom_call.1} parent=0 // pred_fallthru
    _
  // Predicated region
  $region18: #{tpu_custom_call.1} parent=0 // pred_check
    _
  $region19: #{tpu_custom_call.1} parent=0 // pred_check_branch
    %608 = sbr.rel (0) target = $region21
  $region20: #{tpu_custom_call.1} parent=0 // pred_region
    _
  $region21: #{tpu_custom_call.1} parent=0 // pred_fallthru
    _

</llo_original>
